<compile_context>
chip_gen: v7x
topology: tpu7x:2x2x1
jax: 0.10.0
libtpu: 0.0.40
codegen_flags: <defaults>
</compile_context>

<pallas_src>
import functools

import jax
import jax.numpy as jnp
from jax.experimental import pallas as pl
from jax.experimental.pallas import tpu as pltpu


def _grad_loss_kernel(a_ref, b_ref, outx_ref, outy_ref, *,
                      plane_w, tile_b, steps, total_rows, needs_row_mask):
    i = pl.program_id(1)  # sequential ("arbitrary") step inside this core split

    @pl.when(i == 0)
    def _init():
        outx_ref[...] = jnp.zeros_like(outx_ref)
        outy_ref[...] = jnp.zeros_like(outy_ref)

    L = a_ref.shape[-1]
    W = plane_w
    Lx = L - W   # valid width of the x (H-direction) gradient in flat layout
    Ly = L - 1   # valid width of the y (W-direction) gradient in flat layout

    a = a_ref[...]            # (tile_b, L), native dtype
    b = b_ref[...]

    tx = None
    ty = None
    if Lx > 0:
        a_x = a_ref[:, pl.ds(W, Lx)]          # shifted views read from the refs
        b_x = b_ref[:, pl.ds(W, Lx)]
        tx = jnp.abs(jnp.abs(a_x - a[:, :Lx]) - jnp.abs(b_x - b[:, :Lx]))
    if Ly > 0:
        a_y = a_ref[:, pl.ds(1, Ly)]
        b_y = b_ref[:, pl.ds(1, Ly)]
        ty = jnp.abs(jnp.abs(a_y - a[:, :Ly]) - jnp.abs(b_y - b[:, :Ly]))

    if needs_row_mask:
        # Only emitted when nsplit*steps*tile_b != B: mask out rows that fall
        # beyond the real batch (replaces the old host-side zero-padding copy).
        c = pl.program_id(0)
        row0 = (c * steps + i) * tile_b
        rid = row0 + jax.lax.broadcasted_iota(jnp.int32, (tile_b, 1), 0)
        valid = rid < total_rows
        if tx is not None:
            tx = jnp.where(valid, tx, 0)
        if ty is not None:
            ty = jnp.where(valid, ty, 0)

    def batch_reduce(t):
        # Partially reduce over the plane axis with pure vreg adds: (tile_b, X)
        # -> (tile_b//8, 8, X) -> sum axis 0 -> (8, X) f32.
        t = t.astype(jnp.float32)
        g = tile_b // 8
        if g > 1:
            t = t.reshape(g, 8, t.shape[-1]).sum(axis=0)
        return t

    if tx is not None:
        outx_ref[:, :Lx] += batch_reduce(tx)
    if ty is not None:
        outy_ref[:, :Ly] += batch_reduce(ty)


def _vmem_capacity_bytes(default=64 << 20):
    try:
        info = pltpu.get_tpu_info()
        return int(getattr(info, "vmem_capacity_bytes", default))
    except Exception:
        return default


def gradient_loss(a, b):
    """a, b: NCHW arrays. Returns scalar (xloss + yloss) / (N*C*H*W)."""
    assert a.shape == b.shape and a.ndim == 4
    N, C, H, W = a.shape
    B = N * C
    L = H * W

    a2 = a.reshape(B, L)   # lane-dense flattened planes
    b2 = b.reshape(B, L)
    itemsize = jnp.dtype(a.dtype).itemsize
    row_bytes = L * itemsize

    # Generation-aware VMEM budget (v7x has only 64 MiB per TensorCore).
    vmem_cap = _vmem_capacity_bytes()
    budget = min(int(vmem_cap * 0.6), 80 << 20)

    # Split the plane axis across TensorCores only when there is real work.
    nsplit = 2 if B >= 64 else 1

    # Block sizing: ~4-8 MiB per input block; total footprint is
    # 2 inputs x 2 pipeline buffers x block + two small f32 (8, L) outputs.
    out_overhead = 2 * 2 * (8 * L * 4)
    per_block_budget = max(8 * row_bytes, (budget - out_overhead) // 4)
    target_block = min(8 << 20, per_block_budget)
    tile_b = max(8, (target_block // row_bytes) // 8 * 8)
    rows_per_split = pl.cdiv(B, nsplit)
    tile_b = min(tile_b, (rows_per_split + 7) // 8 * 8)

    steps = pl.cdiv(B, nsplit * tile_b)
    nblocks = pl.cdiv(B, tile_b)
    needs_row_mask = (nsplit * steps * tile_b != B)
    needs_clamp = (nsplit * steps > nblocks)   # avoid fully out-of-bounds blocks

    if needs_clamp:
        def ab_map(c, i):
            return (jnp.minimum(c * steps + i, nblocks - 1), 0)
    else:
        def ab_map(c, i):
            return (c * steps + i, 0)

    footprint = 2 * 2 * tile_b * row_bytes + out_overhead
    vmem_limit = int(min(int(vmem_cap * 0.75), max(footprint + (8 << 20), 32 << 20)))

    kernel = functools.partial(
        _grad_loss_kernel, plane_w=W, tile_b=tile_b, steps=steps,
        total_rows=B, needs_row_mask=needs_row_mask)

    out_x, out_y = pl.pallas_call(
        kernel,
        out_shape=(jax.ShapeDtypeStruct((nsplit * 8, L), jnp.float32),
                   jax.ShapeDtypeStruct((nsplit * 8, L), jnp.float32)),
        grid_spec=pltpu.PrefetchScalarGridSpec(
            num_scalar_prefetch=0,
            grid=(nsplit, steps),
            in_specs=[
                pl.BlockSpec((tile_b, L), ab_map),   # a planes
                pl.BlockSpec((tile_b, L), ab_map),   # b planes
            ],
            out_specs=[
                pl.BlockSpec((8, L), lambda c, i: (c, 0)),   # x-term accumulator
                pl.BlockSpec((8, L), lambda c, i: (c, 0)),   # y-term accumulator
            ],
        ),
        compiler_params=pltpu.CompilerParams(
            dimension_semantics=("parallel", "arbitrary"),
            vmem_limit_bytes=vmem_limit,
        ),
        cost_estimate=pl.CostEstimate(
            flops=12 * B * L,
            transcendentals=0,
            bytes_accessed=2 * B * L * itemsize + 2 * nsplit * 8 * L * 4,
        ),
    )(a2, b2)

    # Host-side epilogue: the y row-boundary mask is per-column only, so it can
    # be applied after the in-kernel row reduction; then a single scalar sum.
    ymask_col = (jnp.arange(L, dtype=jnp.int32) % W != (W - 1)).astype(jnp.float32)
    total = jnp.sum(out_x) + jnp.sum(out_y * ymask_col)
    return total / jnp.float32(N * C * H * W)


def _gradient_loss_ref(a, b):
    a = a.astype(jnp.float32)
    b = b.astype(jnp.float32)
    xloss = jnp.sum(
        jnp.abs(jnp.abs(a[:, :, 1:, :] - a[:, :, :-1, :])
                - jnp.abs(b[:, :, 1:, :] - b[:, :, :-1, :])))
    yloss = jnp.sum(
        jnp.abs(jnp.abs(a[:, :, :, 1:] - a[:, :, :, :-1])
                - jnp.abs(b[:, :, :, 1:] - b[:, :, :, :-1])))
    return (xloss + yloss) / (a.shape[0] * a.shape[1] * a.shape[2] * a.shape[3])


if __name__ == "__main__":
    key = jax.random.PRNGKey(0)
    k1, k2 = jax.random.split(key)
    N, C, H, W = 2, 4, 16, 16
    a = jax.random.normal(k1, (N, C, H, W), dtype=jnp.float32)
    b = jax.random.normal(k2, (N, C, H, W), dtype=jnp.float32)

    out = jax.block_until_ready(gradient_loss(a, b))
    ref = jax.block_until_ready(_gradient_loss_ref(a, b))

    assert jnp.allclose(out, ref, rtol=1e-4, atol=1e-5), (out, ref)
    print("KERNEL_OK")
</pallas_src>

<mosaic_0001>
module attributes {stable_mosaic.version = 11 : i64} {
  func.func @_grad_loss_kernel(%arg0: i32, %arg1: i32, %arg2: memref<8x256xf32, #tpu.memory_space<vmem>>, %arg3: memref<8x256xf32, #tpu.memory_space<vmem>>, %arg4: memref<8x256xf32, #tpu.memory_space<vmem>>, %arg5: memref<8x256xf32, #tpu.memory_space<vmem>>) attributes {dimension_semantics = [#tpu.dimension_semantics<parallel>, #tpu.dimension_semantics<arbitrary>], iteration_bounds = array<i64: 1, 1>, scalar_prefetch = 0 : i64, scratch_operands = 0 : i64, tpu.core_type = #tpu.core_type<tc>, window_params = [{transform_indices = @transform_0, window_bounds = array<i64: 8, 256>}, {transform_indices = @transform_1, window_bounds = array<i64: 8, 256>}, {transform_indices = @transform_2, window_bounds = array<i64: 8, 256>}, {transform_indices = @transform_3, window_bounds = array<i64: 8, 256>}]} {
    %c0_i32 = arith.constant 0 : i32
    %0 = arith.cmpi eq, %arg1, %c0_i32 : i32
    %1 = arith.extui %0 : i1 to i32
    %c0_i32_0 = arith.constant 0 : i32
    %2 = arith.cmpi ne, %1, %c0_i32_0 : i32
    scf.if %2 {
      %cst = arith.constant 0.000000e+00 : f32
      %31 = vector.broadcast %cst : f32 to vector<8x256xf32>
      %c0_18 = arith.constant 0 : index
      %c0_19 = arith.constant 0 : index
      %32 = vector.load %arg4[%c0_18, %c0_19] : memref<8x256xf32, #tpu.memory_space<vmem>>, vector<8x256xf32>
      tpu.vector_store %arg4[%c0_18, %c0_19], %31 {strides = array<i32>} : memref<8x256xf32, #tpu.memory_space<vmem>>, vector<8x256xf32>,
      %cst_20 = arith.constant 0.000000e+00 : f32
      %33 = vector.broadcast %cst_20 : f32 to vector<8x256xf32>
      %c0_21 = arith.constant 0 : index
      %c0_22 = arith.constant 0 : index
      %34 = vector.load %arg5[%c0_21, %c0_22] : memref<8x256xf32, #tpu.memory_space<vmem>>, vector<8x256xf32>
      tpu.vector_store %arg5[%c0_21, %c0_22], %33 {strides = array<i32>} : memref<8x256xf32, #tpu.memory_space<vmem>>, vector<8x256xf32>,
    } else {
    }
    %c0 = arith.constant 0 : index
    %c0_1 = arith.constant 0 : index
    %3 = vector.load %arg2[%c0, %c0_1] : memref<8x256xf32, #tpu.memory_space<vmem>>, vector<8x256xf32>
    %c0_2 = arith.constant 0 : index
    %c0_3 = arith.constant 0 : index
    %4 = vector.load %arg3[%c0_2, %c0_3] : memref<8x256xf32, #tpu.memory_space<vmem>>, vector<8x256xf32>
    %c0_4 = arith.constant 0 : index
    %c16 = arith.constant 16 : index
    %5 = vector.load %arg2[%c0_4, %c16] : memref<8x256xf32, #tpu.memory_space<vmem>>, vector<8x240xf32>
    %c0_5 = arith.constant 0 : index
    %c16_6 = arith.constant 16 : index
    %6 = vector.load %arg3[%c0_5, %c16_6] : memref<8x256xf32, #tpu.memory_space<vmem>>, vector<8x240xf32>
    %7 = vector.extract_strided_slice %3 {offsets = [0, 0], sizes = [8, 240], strides = [1, 1]} : vector<8x256xf32> to vector<8x240xf32>
    %8 = arith.subf %5, %7 : vector<8x240xf32>
    %9 = math.absf %8 : vector<8x240xf32>
    %10 = vector.extract_strided_slice %4 {offsets = [0, 0], sizes = [8, 240], strides = [1, 1]} : vector<8x256xf32> to vector<8x240xf32>
    %11 = arith.subf %6, %10 : vector<8x240xf32>
    %12 = math.absf %11 : vector<8x240xf32>
    %13 = arith.subf %9, %12 : vector<8x240xf32>
    %14 = math.absf %13 : vector<8x240xf32>
    %c0_7 = arith.constant 0 : index
    %c1 = arith.constant 1 : index
    %15 = vector.load %arg2[%c0_7, %c1] : memref<8x256xf32, #tpu.memory_space<vmem>>, vector<8x255xf32>
    %c0_8 = arith.constant 0 : index
    %c1_9 = arith.constant 1 : index
    %16 = vector.load %arg3[%c0_8, %c1_9] : memref<8x256xf32, #tpu.memory_space<vmem>>, vector<8x255xf32>
    %17 = vector.extract_strided_slice %3 {offsets = [0, 0], sizes = [8, 255], strides = [1, 1]} : vector<8x256xf32> to vector<8x255xf32>
    %18 = arith.subf %15, %17 : vector<8x255xf32>
    %19 = math.absf %18 : vector<8x255xf32>
    %20 = vector.extract_strided_slice %4 {offsets = [0, 0], sizes = [8, 255], strides = [1, 1]} : vector<8x256xf32> to vector<8x255xf32>
    %21 = arith.subf %16, %20 : vector<8x255xf32>
    %22 = math.absf %21 : vector<8x255xf32>
    %23 = arith.subf %19, %22 : vector<8x255xf32>
    %24 = math.absf %23 : vector<8x255xf32>
    %c0_10 = arith.constant 0 : index
    %c0_11 = arith.constant 0 : index
    %25 = vector.load %arg4[%c0_10, %c0_11] : memref<8x256xf32, #tpu.memory_space<vmem>>, vector<8x240xf32>
    %26 = arith.addf %25, %14 : vector<8x240xf32>
    %c0_12 = arith.constant 0 : index
    %c0_13 = arith.constant 0 : index
    %27 = vector.load %arg4[%c0_12, %c0_13] : memref<8x256xf32, #tpu.memory_space<vmem>>, vector<8x240xf32>
    tpu.vector_store %arg4[%c0_12, %c0_13], %26 {strides = array<i32>} : memref<8x256xf32, #tpu.memory_space<vmem>>, vector<8x240xf32>,
    %c0_14 = arith.constant 0 : index
    %c0_15 = arith.constant 0 : index
    %28 = vector.load %arg5[%c0_14, %c0_15] : memref<8x256xf32, #tpu.memory_space<vmem>>, vector<8x255xf32>
    %29 = arith.addf %28, %24 : vector<8x255xf32>
    %c0_16 = arith.constant 0 : index
    %c0_17 = arith.constant 0 : index
    %30 = vector.load %arg5[%c0_16, %c0_17] : memref<8x256xf32, #tpu.memory_space<vmem>>, vector<8x255xf32>
    tpu.vector_store %arg5[%c0_16, %c0_17], %29 {strides = array<i32>} : memref<8x256xf32, #tpu.memory_space<vmem>>, vector<8x255xf32>,
    return
  }
  func.func @transform_0(%arg0: i32, %arg1: i32) -> (i32, i32) {
    %c1_i32 = arith.constant 1 : i32
    %0 = arith.muli %arg0, %c1_i32 : i32
    %1 = arith.addi %0, %arg1 : i32
    %c0_i32 = arith.constant 0 : i32
    %c0_i32_0 = arith.constant 0 : i32
    return %1, %c0_i32 : i32, i32
  }
  func.func @transform_1(%arg0: i32, %arg1: i32) -> (i32, i32) {
    %c1_i32 = arith.constant 1 : i32
    %0 = arith.muli %arg0, %c1_i32 : i32
    %1 = arith.addi %0, %arg1 : i32
    %c0_i32 = arith.constant 0 : i32
    %c0_i32_0 = arith.constant 0 : i32
    return %1, %c0_i32 : i32, i32
  }
  func.func @transform_2(%arg0: i32, %arg1: i32) -> (i32, i32) {
    %c0_i32 = arith.constant 0 : i32
    %c0_i32_0 = arith.constant 0 : i32
    return %arg0, %c0_i32 : i32, i32
  }
  func.func @transform_3(%arg0: i32, %arg1: i32) -> (i32, i32) {
    %c0_i32 = arith.constant 0 : i32
    %c0_i32_0 = arith.constant 0 : i32
    return %arg0, %c0_i32 : i32, i32
  }
}

</mosaic_0001>

<llo_original>
// kernel: tpu_custom_call.1
$region0: #{tpu_custom_call.1}
  #allocation0 [shape = 'u32[]', space=smem, size = 0x4, offset = 0x4, fixed_abs, tag = 'smem constant byte address 0x4 - core index']
  #allocation1 [shape = 'u32[144,128]{1,0:T(1,128)}', space=vmem, size = 0x12000, scoped, tag = 'internal scratch']
  %s0 = inlined_call_operand.hbm [shape: f32[8,256], index: 0, kind: input, shape index: {}]
  %s1 = inlined_call_operand.hbm [shape: f32[8,256], index: 1, kind: input, shape index: {}]
  %s2 = inlined_call_operand.hbm [shape: f32[8,256], index: 2, kind: output, shape index: {0}]
  %s3 = inlined_call_operand.hbm [shape: f32[8,256], index: 3, kind: output, shape index: {1}]
  %4 = xla_tuple %s2, %s3
  %s5 = sld [smem:[#allocation0]]
  $region38: #{tpu_custom_call.1} parent=0
    _
  %s7 = ssub.s32 1, %s5
  %s8 = scalar_select 0, %s7, %s5
  $region1: #{tpu_custom_call.1} parent=0
    #allocation2 [shape = 'u8[8192]{0}', space=vmem, size = 0x2000, scoped, tag = 'input window, operand 0, single buffered']
    #allocation3 [shape = 's32[1]{0}', space=sflag, size = 0x4, scoped, tag = 'scoped memory for tpu_custom_call.1']
    #allocation4 [shape = 's32[1]{0}', space=sflag, size = 0x4, scoped, tag = 'scoped memory for tpu_custom_call.1']
    #allocation5 [shape = 'u8[8192]{0}', space=vmem, size = 0x2000, scoped, tag = 'input window, operand 1, single buffered']
    #allocation6 [shape = 's32[1]{0}', space=sflag, size = 0x4, scoped, tag = 'scoped memory for tpu_custom_call.1']
    #allocation7 [shape = 'u8[8192]{0}', space=vmem, size = 0x2000, scoped, tag = 'output window, operand 0, single buffered']
    #allocation8 [shape = 'u8[8192]{0}', space=vmem, size = 0x2000, scoped, tag = 'output window, operand 1, single buffered']
    #allocation9 [shape = 's32[1]{0}', space=sflag, size = 0x4, scoped, tag = 'scoped memory for tpu_custom_call.1']
    %9 = vsyncpa [#allocation3], 0
    %10 = vsyncpa [#allocation6], 0
    %11 = vsyncpa [#allocation4], 0
    %12 = vsyncpa [#allocation9], 0
    // Predicated region
    $region2: #{tpu_custom_call.1} parent=1 // pred_check
      _
    $region3: #{tpu_custom_call.1} parent=1 // pred_check_branch
      %14 = sbr.rel (0) target = $region5
    $region4: #{tpu_custom_call.1} parent=1 // pred_region
      %s15 = sadd.s32 0, 0
      %s17 = ssub.s32 256, 256
      %18 = vsyncadd [#allocation3], %s17
      %s19 = smul.addr %s15, 2
      %s20 = smul.addr %s19, 128
      %s21 = scalar_lea.hbm %s0, %s20
      %s23 = sshll.u32 [#allocation2], 4
      %s24 = int_to_ptr.vmem [resolvable:$true] %s23
      %26 = dma.hbm_to_vmem [thread:$0]  %s21, 256, %s24, [#allocation3]
    $region5: #{tpu_custom_call.1} parent=1 // pred_fallthru
      _
    // Predicated region
    $region6: #{tpu_custom_call.1} parent=1 // pred_check
      _
    $region7: #{tpu_custom_call.1} parent=1 // pred_check_branch
      %28 = sbr.rel (0) target = $region9
    $region8: #{tpu_custom_call.1} parent=1 // pred_region
      %s29 = sadd.s32 0, 0
      %s31 = ssub.s32 256, 256
      %32 = vsyncadd [#allocation6], %s31
      %s33 = smul.addr %s29, 2
      %s34 = smul.addr %s33, 128
      %s35 = scalar_lea.hbm %s1, %s34
      %s37 = sshll.u32 [#allocation5], 4
      %s38 = int_to_ptr.vmem [resolvable:$true] %s37
      %40 = dma.hbm_to_vmem [thread:$0]  %s35, 256, %s38, [#allocation6]
    $region9: #{tpu_custom_call.1} parent=1 // pred_fallthru
      _
    // Predicated region
    $region10: #{tpu_custom_call.1} parent=1 // pred_check
      _
    $region11: #{tpu_custom_call.1} parent=1 // pred_check_branch
      %42 = sbr.rel (0) target = $region13
    $region12: #{tpu_custom_call.1} parent=1 // pred_region
      %43 = dma.done [#allocation3], 256
    $region13: #{tpu_custom_call.1} parent=1 // pred_fallthru
      _
    // Predicated region
    $region14: #{tpu_custom_call.1} parent=1 // pred_check
      _
    $region15: #{tpu_custom_call.1} parent=1 // pred_check_branch
      %45 = sbr.rel (0) target = $region17
    $region16: #{tpu_custom_call.1} parent=1 // pred_region
      %46 = dma.done [#allocation6], 256
    $region17: #{tpu_custom_call.1} parent=1 // pred_fallthru
      _
    %s47 = sadd.s32 0, 0
    %s48 = sadd.s32 0, 0
    %p49 = scmp.eq.s32.totalorder 0, 0
    // Predicated region
    $region18: #{tpu_custom_call.1} parent=1 // pred_check
      %p50 = pneg %p49
    $region19: #{tpu_custom_call.1} parent=1 // pred_check_branch
      %52 = sbr.rel (%p50) target = $region21
    $region20: #{tpu_custom_call.1} parent=1 // pred_region
      %53 = vst [vmem:[#allocation7] sm:$0xff] 0.0
      %54 = vst [vmem:[#allocation7 + $0x8] sm:$0xff] 0.0
      %55 = vst [vmem:[#allocation8] sm:$0xff] 0.0
      %56 = vst [vmem:[#allocation8 + $0x8] sm:$0xff] 0.0
    $region21: #{tpu_custom_call.1} parent=1 // pred_fallthru
      _
    %v57 = vld [vmem:[#allocation2] sm:$0xff]
    %v58 = vld [vmem:[#allocation2 + $0x8] sm:$0xff]
    %v59 = vld [vmem:[#allocation5] sm:$0xff]
    %v60 = vld [vmem:[#allocation5 + $0x8] sm:$0xff]
    %63 = vrot.lane.b32.xlu0 %v57, 16
    %v64 = vpop.permute.xlu0 %63
    %65 = vrot.lane.b32.xlu0 %v58, 16
    %v66 = vpop.permute.xlu0 %65
    %vm67 = vcmask 130048
    %v68 = vsel %vm67, %v64, %v66
    %v71 = vsub.f32 %v57, %v64
    %v72 = vsub.f32 %v58, %v68
    %v73 = vand.u32 2147483647, %v71
    %v74 = vand.u32 2147483647, %v72
    %77 = vrot.lane.b32.xlu0 %v59, 16
    %v78 = vpop.permute.xlu0 %77
    %79 = vrot.lane.b32.xlu0 %v60, 16
    %v80 = vpop.permute.xlu0 %79
    %v81 = vsel %vm67, %v78, %v80
    %v84 = vsub.f32 %v59, %v78
    %v85 = vsub.f32 %v60, %v81
    %v86 = vand.u32 2147483647, %v84
    %v87 = vand.u32 2147483647, %v85
    %v88 = vsub.f32 %v73, %v86
    %v89 = vsub.f32 %v74, %v87
    %v90 = vand.u32 2147483647, %v88
    %v91 = vand.u32 2147483647, %v89
    %92 = vrot.lane.b32.xlu0 %v57, 1
    %v93 = vpop.permute.xlu0 %92
    %94 = vrot.lane.b32.xlu0 %v58, 1
    %v95 = vpop.permute.xlu0 %94
    %vm96 = vcmask 7168
    %v97 = vsel %vm96, %v93, %v95
    %v100 = vsub.f32 %v57, %v93
    %v101 = vsub.f32 %v58, %v97
    %v102 = vand.u32 2147483647, %v100
    %v103 = vand.u32 2147483647, %v101
    %104 = vrot.lane.b32.xlu0 %v59, 1
    %v105 = vpop.permute.xlu0 %104
    %106 = vrot.lane.b32.xlu0 %v60, 1
    %v107 = vpop.permute.xlu0 %106
    %v108 = vsel %vm96, %v105, %v107
    %v111 = vsub.f32 %v59, %v105
    %v112 = vsub.f32 %v60, %v108
    %v113 = vand.u32 2147483647, %v111
    %v114 = vand.u32 2147483647, %v112
    %v115 = vsub.f32 %v102, %v113
    %v116 = vsub.f32 %v103, %v114
    %v117 = vand.u32 2147483647, %v115
    %v118 = vand.u32 2147483647, %v116
    %v119 = vld [vmem:[#allocation7] sm:$0xff]
    %v120 = vld [vmem:[#allocation7 + $0x8] sm:$0xff]
    %123 = vrot.lane.b32.xlu0 %v90, 112
    %v124 = vpop.permute.xlu0 %123
    %125 = vrot.lane.b32.xlu0 %v91, 112
    %v126 = vpop.permute.xlu0 %125
    %vm127 = vcmask 916480
    %v128 = vsel %vm127, %v124, %v126
    %v131 = vadd.f32 %v119, %v128
    %v132 = vadd.f32 %v120, %v126
    %133 = vst [vmem:[#allocation7] sm:$0xff] %v131
    %134 = vst.msk [vmem:[#allocation7 + $0x8] sm:$0xff] %vm127, %v132
    %v135 = vld [vmem:[#allocation8] sm:$0xff]
    %v136 = vld [vmem:[#allocation8 + $0x8] sm:$0xff]
    %139 = vrot.lane.b32.xlu0 %v117, 127
    %v140 = vpop.permute.xlu0 %139
    %141 = vrot.lane.b32.xlu0 %v118, 127
    %v142 = vpop.permute.xlu0 %141
    %vm143 = vcmask 1039360
    %v144 = vsel %vm143, %v140, %v142
    %v147 = vadd.f32 %v135, %v144
    %v148 = vadd.f32 %v136, %v142
    %149 = vst [vmem:[#allocation8] sm:$0xff] %v147
    %150 = vst.msk [vmem:[#allocation8 + $0x8] sm:$0xff] %vm143, %v148
    // Predicated region
    $region22: #{tpu_custom_call.1} parent=1 // pred_check
      _
    $region23: #{tpu_custom_call.1} parent=1 // pred_check_branch
      %152 = sbr.rel (0) target = $region25
    $region24: #{tpu_custom_call.1} parent=1 // pred_region
      %s154 = ssub.s32 256, 256
      %155 = vsyncadd [#allocation4], %s154
      %s157 = sshll.u32 [#allocation7], 4
      %s158 = int_to_ptr.vmem [resolvable:$true] %s157
      %160 = dma.vmem_to_hbm [thread:$0]  %s158, 256, %s2, [#allocation4]
    $region25: #{tpu_custom_call.1} parent=1 // pred_fallthru
      _
    // Predicated region
    $region26: #{tpu_custom_call.1} parent=1 // pred_check
      _
    $region27: #{tpu_custom_call.1} parent=1 // pred_check_branch
      %162 = sbr.rel (0) target = $region29
    $region28: #{tpu_custom_call.1} parent=1 // pred_region
      %s164 = ssub.s32 256, 256
      %165 = vsyncadd [#allocation9], %s164
      %s167 = sshll.u32 [#allocation8], 4
      %s168 = int_to_ptr.vmem [resolvable:$true] %s167
      %170 = dma.vmem_to_hbm [thread:$0]  %s168, 256, %s3, [#allocation9]
    $region29: #{tpu_custom_call.1} parent=1 // pred_fallthru
      _
    // Predicated region
    $region30: #{tpu_custom_call.1} parent=1 // pred_check
      _
    $region31: #{tpu_custom_call.1} parent=1 // pred_check_branch
      %172 = sbr.rel (0) target = $region33
    $region32: #{tpu_custom_call.1} parent=1 // pred_region
      %173 = dma.done [#allocation4], 256
    $region33: #{tpu_custom_call.1} parent=1 // pred_fallthru
      _
    // Predicated region
    $region34: #{tpu_custom_call.1} parent=1 // pred_check
      _
    $region35: #{tpu_custom_call.1} parent=1 // pred_check_branch
      %175 = sbr.rel (0) target = $region37
    $region36: #{tpu_custom_call.1} parent=1 // pred_region
      %176 = dma.done [#allocation9], 256
    $region37: #{tpu_custom_call.1} parent=1 // pred_fallthru
      _
    %177 = vsyncpa [#allocation3], 1
    %178 = vsyncpa [#allocation6], 1
    %179 = vsyncpa [#allocation4], 1
    %180 = vsyncpa [#allocation9], 1

</llo_original>
